<compile_context>
chip_gen: v6e
topology: v6e:2x2x1
jax: 0.10.0
libtpu: 0.0.40
codegen_flags: <defaults>
</compile_context>

<pallas_src>
import jax
import jax.numpy as jnp
from jax.experimental import pallas as pl
from jax.experimental.pallas import tpu as pltpu


def _attn_kernel(scale_ref, q_ref, kt_ref, v_ref, o_ref):
    # q_ref: (tm, K)   kt_ref: (K, N)   v_ref: (N, D)   o_ref: (tm, D)
    # score = x1 @ x2.T  (x2 arrives pre-transposed -> canonical MK@KN matmul)
    s = jnp.dot(q_ref[...], kt_ref[...], preferred_element_type=jnp.float32)

    # divide by the scalar divisor x3: one scalar reciprocal + broadcast mul
    s = s * (1.0 / scale_ref[0])

    # numerically stable softmax along the last dim; exact divide — the kernel
    # is latency-bound at these tile sizes, so an approx EUP reciprocal would
    # buy zero cycles and only cost accuracy.
    m = jnp.max(s, axis=-1, keepdims=True)
    e = jnp.exp(s - m)
    p = e / jnp.sum(e, axis=-1, keepdims=True)

    # dropout (inference semantics) == identity
    # out = p @ x5  (MXU, f32 accumulation)
    o_ref[...] = jnp.dot(p, v_ref[...],
                         preferred_element_type=jnp.float32).astype(o_ref.dtype)


def model_forward(x1, x2, x3, x4, x5, *, block_m=128):
    """x1:(M,K) x2:(N,K) x3:(1,) x4:(*) x5:(N,D) -> (M,D) float32.

    TODO(synk): torch.nn.functional.dropout(p=tensor) in the fuzzed source is
    training-mode random (and ill-typed for a tensor p); we implement the
    deterministic inference-mode semantics (identity), so x4 is unused.
    """
    del x4
    M, K = x1.shape
    N, K2 = x2.shape
    N2, D = x5.shape
    assert K == K2 and N == N2

    # Present x2 as (K, N) (layout plumbing in the wrapper) so the kernel's
    # first matmul is the canonical (M,K)@(K,N) MXU feed.
    x2t = jnp.transpose(x2)
    x3 = x3.reshape((1,)).astype(jnp.float32)

    # M-tile: stream block_m-row blocks when M divides evenly, otherwise fall
    # back to a single full-M block (a block dim equal to the full array dim
    # is always a legal TPU block shape).
    tm = block_m if (M % block_m == 0) else M
    grid = (M // tm,)

    # Explicit VMEM budget: resident K/V + double-buffered streamed x1/out
    # blocks + softmax intermediates, with 2x headroom, clamped to [32, 60] MiB
    # (scoped defaults are 16/32 MiB; v7x physical VMEM is 64 MiB).
    # TODO(synk): for N large enough that the (tm, N) score tile breaks this
    # budget, switch to a flash-style online softmax over an N grid axis.
    est_bytes = 4 * ((K * N + N * D) + 2 * (tm * K + tm * D) + 3 * tm * N)
    vmem_limit = int(min(60 * 2**20, max(32 * 2**20, 2 * est_bytes)))

    return pl.pallas_call(
        _attn_kernel,
        out_shape=jax.ShapeDtypeStruct((M, D), jnp.float32),
        grid=grid,
        in_specs=[
            pl.BlockSpec(memory_space=pltpu.SMEM),        # x3 scalar divisor
            pl.BlockSpec((tm, K), lambda i: (i, 0)),      # x1, streamed over M
            pl.BlockSpec((K, N), lambda i: (0, 0)),       # x2.T, resident
            pl.BlockSpec((N, D), lambda i: (0, 0)),       # x5, resident
        ],
        out_specs=pl.BlockSpec((tm, D), lambda i: (i, 0)),
        compiler_params=pltpu.CompilerParams(
            dimension_semantics=("parallel",),
            vmem_limit_bytes=vmem_limit,
        ),
    )(x3, x1, x2t, x5)


def _reference(x1, x2, x3, x4, x5):
    del x4
    s = jnp.dot(x1, x2.T, precision=jax.lax.Precision.HIGHEST) / x3[0]
    p = jax.nn.softmax(s, axis=-1)
    return jnp.dot(p, x5, precision=jax.lax.Precision.HIGHEST)


if __name__ == "__main__":
    # Small, lane-dense shapes consistent with the module contract:
    # (M,K) @ (N,K).T -> (M,N), then (M,N) @ (N,D) -> (M,D).
    # M=256 exercises the 2-step gridded / streamed path.
    M, K, N, D = 256, 128, 128, 128
    key = jax.random.PRNGKey(0)
    k1, k2, k3, k5 = jax.random.split(key, 4)

    x1 = jax.random.normal(k1, (M, K), dtype=jnp.float32)
    x2 = jax.random.normal(k2, (N, K), dtype=jnp.float32)
    x3 = jnp.abs(jax.random.normal(k3, (1,), dtype=jnp.float32)) + 0.5  # divisor
    x4 = jnp.array([0.1], dtype=jnp.float32)                            # dropout p
    x5 = jax.random.normal(k5, (N, D), dtype=jnp.float32)

    out = jax.block_until_ready(model_forward(x1, x2, x3, x4, x5))

    ref = _reference(x1, x2, x3, x4, x5)
    assert out.shape == (M, D)
    assert jnp.allclose(out, ref, atol=1e-3, rtol=1e-3), "mismatch vs reference"

    print("KERNEL_OK")
</pallas_src>

<mosaic_0001>
module attributes {stable_mosaic.version = 11 : i64} {
  func.func @_attn_kernel(%arg0: i32, %arg1: memref<1xf32, #tpu.memory_space<smem>>, %arg2: memref<128x128xf32, #tpu.memory_space<vmem>>, %arg3: memref<128x128xf32, #tpu.memory_space<vmem>>, %arg4: memref<128x128xf32, #tpu.memory_space<vmem>>, %arg5: memref<128x128xf32, #tpu.memory_space<vmem>>) attributes {dimension_semantics = [#tpu.dimension_semantics<parallel>], iteration_bounds = array<i64: 2>, scalar_prefetch = 0 : i64, scratch_operands = 0 : i64, tpu.core_type = #tpu.core_type<tc>, window_params = [{transform_indices = @transform_0, window_bounds = array<i64: 1>}, {transform_indices = @transform_1, window_bounds = array<i64: 128, 128>}, {pipeline_mode = #tpu.pipeline_mode<synchronous>, transform_indices = @transform_2, window_bounds = array<i64: 128, 128>}, {pipeline_mode = #tpu.pipeline_mode<synchronous>, transform_indices = @transform_3, window_bounds = array<i64: 128, 128>}, {transform_indices = @transform_4, window_bounds = array<i64: 128, 128>}]} {
    %c0 = arith.constant 0 : index
    %c0_0 = arith.constant 0 : index
    %0 = vector.load %arg2[%c0, %c0_0] : memref<128x128xf32, #tpu.memory_space<vmem>>, vector<128x128xf32>
    %c0_1 = arith.constant 0 : index
    %c0_2 = arith.constant 0 : index
    %1 = vector.load %arg3[%c0_1, %c0_2] : memref<128x128xf32, #tpu.memory_space<vmem>>, vector<128x128xf32>
    %cst = arith.constant dense<0.000000e+00> : vector<128x128xf32>
    %2 = tpu.matmul %0, %1, %cst {dimension_numbers = #tpu.dot_dimension_numbers<[1], [0], [0], [1], [0, 0, 1, 1], [], []>} : vector<128x128xf32>, vector<128x128xf32>, vector<128x128xf32> -> vector<128x128xf32>
    %c0_3 = arith.constant 0 : index
    %3 = memref.load %arg1[%c0_3] : memref<1xf32, #tpu.memory_space<smem>>
    %cst_4 = arith.constant 1.000000e+00 : f32
    %4 = arith.divf %cst_4, %3 : f32
    %5 = vector.broadcast %4 : f32 to vector<128x128xf32>
    %6 = arith.mulf %2, %5 : vector<128x128xf32>
    %cst_5 = arith.constant dense<0xFF800000> : vector<128xf32>
    %7 = vector.multi_reduction <maximumf>, %6, %cst_5 [1] : vector<128x128xf32> to vector<128xf32>
    %8 = vector.shape_cast %7 : vector<128xf32> to vector<128x1xf32>
    %9 = vector.broadcast %8 : vector<128x1xf32> to vector<128x128xf32>
    %10 = arith.subf %6, %9 : vector<128x128xf32>
    %11 = math.exp %10 : vector<128x128xf32>
    %cst_6 = arith.constant dense<0.000000e+00> : vector<128xf32>
    %12 = vector.multi_reduction <add>, %11, %cst_6 [1] : vector<128x128xf32> to vector<128xf32>
    %13 = vector.shape_cast %12 : vector<128xf32> to vector<128x1xf32>
    %14 = vector.broadcast %13 : vector<128x1xf32> to vector<128x128xf32>
    %15 = arith.divf %11, %14 : vector<128x128xf32>
    %c0_7 = arith.constant 0 : index
    %c0_8 = arith.constant 0 : index
    %16 = vector.load %arg4[%c0_7, %c0_8] : memref<128x128xf32, #tpu.memory_space<vmem>>, vector<128x128xf32>
    %cst_9 = arith.constant dense<0.000000e+00> : vector<128x128xf32>
    %17 = tpu.matmul %15, %16, %cst_9 {dimension_numbers = #tpu.dot_dimension_numbers<[1], [0], [0], [1], [0, 0, 1, 1], [], []>} : vector<128x128xf32>, vector<128x128xf32>, vector<128x128xf32> -> vector<128x128xf32>
    %c0_10 = arith.constant 0 : index
    %c0_11 = arith.constant 0 : index
    %18 = vector.load %arg5[%c0_10, %c0_11] : memref<128x128xf32, #tpu.memory_space<vmem>>, vector<128x128xf32>
    tpu.vector_store %arg5[%c0_10, %c0_11], %17 {strides = array<i32>} : memref<128x128xf32, #tpu.memory_space<vmem>>, vector<128x128xf32>,
    return
  }
  func.func @transform_0(%arg0: i32) -> i32 {
    %c0_i32 = arith.constant 0 : i32
    %c0_i32_0 = arith.constant 0 : i32
    return %c0_i32 : i32
  }
  func.func @transform_1(%arg0: i32) -> (i32, i32) {
    %c0_i32 = arith.constant 0 : i32
    %c0_i32_0 = arith.constant 0 : i32
    return %arg0, %c0_i32 : i32, i32
  }
  func.func @transform_2(%arg0: i32) -> (i32, i32) {
    %c0_i32 = arith.constant 0 : i32
    %c0_i32_0 = arith.constant 0 : i32
    %c0_i32_1 = arith.constant 0 : i32
    return %c0_i32, %c0_i32_0 : i32, i32
  }
  func.func @transform_3(%arg0: i32) -> (i32, i32) {
    %c0_i32 = arith.constant 0 : i32
    %c0_i32_0 = arith.constant 0 : i32
    %c0_i32_1 = arith.constant 0 : i32
    return %c0_i32, %c0_i32_0 : i32, i32
  }
  func.func @transform_4(%arg0: i32) -> (i32, i32) {
    %c0_i32 = arith.constant 0 : i32
    %c0_i32_0 = arith.constant 0 : i32
    return %arg0, %c0_i32 : i32, i32
  }
}

</mosaic_0001>

<llo_original>
// kernel: tpu_custom_call.1
$region0: #{tpu_custom_call.1}
  #allocation0 [shape = 'u32[]', space=smem, size = 0x4, offset = 0x4, fixed_abs, tag = 'smem constant byte address 0x4 - core index']
  #allocation1 [shape = 'u32[144,128]{1,0:T(1,128)}', space=vmem, size = 0x12000, scoped, tag = 'internal scratch']
  #allocation2 [shape = 'f32[1]{0:T(128)S(6)}', space=smem, size = 0x200, scoped, tag = 'scoped memory for tpu_custom_call.1']
  %s0 = inlined_call_operand.<no memory space> [shape: f32[1], index: 0, kind: input, shape index: {}]
  %s1 = inlined_call_operand.hbm [shape: f32[256,128], index: 1, kind: input, shape index: {}]
  %s2 = inlined_call_operand.hbm [shape: f32[128,128], index: 2, kind: input, shape index: {}]
  %s3 = inlined_call_operand.hbm [shape: f32[128,128], index: 3, kind: input, shape index: {}]
  %s4 = inlined_call_operand.hbm [shape: f32[256,128], index: 4, kind: output, shape index: {}]
  %s5 = sld [smem:[#allocation0]]
  $region61: #{tpu_custom_call.1} parent=0
    _
  %s7 = ssub.s32 1, %s5
  %s8 = scalar_select 0, %s7, %s5
  %9 = sst [smem:[#allocation2]] %s0
  $region1: #{tpu_custom_call.1} parent=0
    #allocation3 [shape = 'u8[131072]{0}', space=vmem, size = 0x20000, scoped, tag = 'input window, operand 1']
    #allocation4 [shape = 's32[2]{0}', space=sflag, size = 0x8, scoped, tag = 'scoped memory for tpu_custom_call.1']
    #allocation5 [shape = 's32[2]{0}', space=sflag, size = 0x8, scoped, tag = 'scoped memory for tpu_custom_call.1']
    #allocation6 [shape = 'u8[65536]{0}', space=vmem, size = 0x10000, scoped, tag = 'input window, operand 2, single buffered']
    #allocation7 [shape = 's32[1]{0}', space=sflag, size = 0x4, scoped, tag = 'scoped memory for tpu_custom_call.1']
    #allocation8 [shape = 'u8[65536]{0}', space=vmem, size = 0x10000, scoped, tag = 'input window, operand 3, single buffered']
    #allocation9 [shape = 'u8[131072]{0}', space=vmem, size = 0x20000, scoped, tag = 'output window, operand 0']
    %10 = vsyncpa [#allocation4], 0
    %s11 = scalar_lea.sflag [#allocation4], 1
    %12 = vsyncpa %s11, 0
    %13 = vsyncpa [#allocation7], 0
    %14 = vsyncpa [#allocation5], 0
    %s15 = scalar_lea.sflag [#allocation5], 1
    %16 = vsyncpa %s15, 0
    loop: start=0, step=1, limit=4
    $region2: #{tpu_custom_call.1} parent=1 // loop_pre_header
      _
    $region3: #{tpu_custom_call.1} parent=1 // loop_header
      %s18 = sphi 0, %s22
      %p19 = scmp.ge.s32.totalorder %s18, 4
      %s26 = sphi 0, %s26
      %s28 = sphi 0, %s26
      %s29 = sphi 0, %s28
      %s43 = sphi 0, %s29
      %s49 = sphi 0, %s51
      %s52 = sphi 0, %s49
      %s53 = sphi 0, %s52
      %s69 = sphi 0, %s53
      %s73 = sphi 0, %s73
      %s75 = sphi 0, %s73
      %s76 = sphi 0, %s75
      %s90 = sphi 0, %s76
      %s94 = sphi 0, %s94
      %s96 = sphi 0, %s94
      %s97 = sphi 0, %s96
      %s111 = sphi 0, %s97
      %s117 = sphi 0, %s119
      %s120 = sphi 0, %s117
      %s121 = sphi 0, %s120
      %s137 = sphi 0, %s121
    $region4: #{tpu_custom_call.1} parent=1 // loop_header_branch
      %21 = sbr.rel (%p19) target = $region8
    $region5: #{tpu_custom_call.1} parent=1 // loop_body
      %s23 = ssub.s32 %s18, 1
      %s24 = ssub.s32 %s18, 2
      %s25 = sadd.s32 %s18, 1
      %s27 = sadd.s32 %s26, 1
      %p30 = scmp.eq.s32.totalorder %s18, 1
      %p31 = scmp.ne.s32.totalorder %s26, %s28
      %p32 = scmp.eq.s32.totalorder %s18, 0
      %p33 = por %p31, %p32
      %p34 = scmp.ne.s32.totalorder %s26, %s28
      %p35 = scmp.eq.s32.totalorder %s23, 1
      %p36 = por %p34, %p35
      %p37 = scmp.ne.s32.totalorder %s28, %s29
      %p38 = scmp.eq.s32.totalorder %s23, 0
      %p39 = por %p37, %p38
      %p40 = scmp.ne.s32.totalorder %s28, %s29
      %p41 = scmp.eq.s32.totalorder %s24, 1
      %p42 = por %p40, %p41
      %p44 = scmp.ne.s32.totalorder %s29, %s43
      %p45 = scmp.eq.s32.totalorder %s24, 0
      %p46 = por %p44, %p45
      %s47 = ssub.s32 %s18, %s25
      %p48 = scmp.eq.s32.totalorder %s47, 0
      %s50 = sadd.s32 %s49, 1
      %s51 = scalar_select %p48, %s49, %s50
      %p54 = pneg %p48
      %p55 = scmp.eq.s32.totalorder %s18, 1
      %p56 = por %p54, %p55
      %p57 = scmp.ne.s32.totalorder %s49, %s52
      %p58 = scmp.eq.s32.totalorder %s18, 0
      %p59 = por %p57, %p58
      %p60 = scmp.ne.s32.totalorder %s49, %s52
      %p61 = scmp.eq.s32.totalorder %s23, 1
      %p62 = por %p60, %p61
      %p63 = scmp.ne.s32.totalorder %s52, %s53
      %p64 = scmp.eq.s32.totalorder %s23, 0
      %p65 = por %p63, %p64
      %p66 = scmp.ne.s32.totalorder %s52, %s53
      %p67 = scmp.eq.s32.totalorder %s24, 1
      %p68 = por %p66, %p67
      %p70 = scmp.ne.s32.totalorder %s53, %s69
      %p71 = scmp.eq.s32.totalorder %s24, 0
      %p72 = por %p70, %p71
      %s74 = sadd.s32 %s73, 1
      %p77 = scmp.eq.s32.totalorder %s18, 1
      %p78 = scmp.ne.s32.totalorder %s73, %s75
      %p79 = scmp.eq.s32.totalorder %s18, 0
      %p80 = por %p78, %p79
      %p81 = scmp.ne.s32.totalorder %s73, %s75
      %p82 = scmp.eq.s32.totalorder %s23, 1
      %p83 = por %p81, %p82
      %p84 = scmp.ne.s32.totalorder %s75, %s76
      %p85 = scmp.eq.s32.totalorder %s23, 0
      %p86 = por %p84, %p85
      %p87 = scmp.ne.s32.totalorder %s75, %s76
      %p88 = scmp.eq.s32.totalorder %s24, 1
      %p89 = por %p87, %p88
      %p91 = scmp.ne.s32.totalorder %s76, %s90
      %p92 = scmp.eq.s32.totalorder %s24, 0
      %p93 = por %p91, %p92
      %s95 = sadd.s32 %s94, 1
      %p98 = scmp.eq.s32.totalorder %s18, 1
      %p99 = scmp.ne.s32.totalorder %s94, %s96
      %p100 = scmp.eq.s32.totalorder %s18, 0
      %p101 = por %p99, %p100
      %p102 = scmp.ne.s32.totalorder %s94, %s96
      %p103 = scmp.eq.s32.totalorder %s23, 1
      %p104 = por %p102, %p103
      %p105 = scmp.ne.s32.totalorder %s96, %s97
      %p106 = scmp.eq.s32.totalorder %s23, 0
      %p107 = por %p105, %p106
      %p108 = scmp.ne.s32.totalorder %s96, %s97
      %p109 = scmp.eq.s32.totalorder %s24, 1
      %p110 = por %p108, %p109
      %p112 = scmp.ne.s32.totalorder %s97, %s111
      %p113 = scmp.eq.s32.totalorder %s24, 0
      %p114 = por %p112, %p113
      %s115 = ssub.s32 %s18, %s25
      %p116 = scmp.eq.s32.totalorder %s115, 0
      %s118 = sadd.s32 %s117, 1
      %s119 = scalar_select %p116, %s117, %s118
      %p122 = pneg %p116
      %p123 = scmp.eq.s32.totalorder %s18, 1
      %p124 = por %p122, %p123
      %p125 = scmp.ne.s32.totalorder %s117, %s120
      %p126 = scmp.eq.s32.totalorder %s18, 0
      %p127 = por %p125, %p126
      %p128 = scmp.ne.s32.totalorder %s117, %s120
      %p129 = scmp.eq.s32.totalorder %s23, 1
      %p130 = por %p128, %p129
      %p131 = scmp.ne.s32.totalorder %s120, %s121
      %p132 = scmp.eq.s32.totalorder %s23, 0
      %p133 = por %p131, %p132
      %p134 = scmp.ne.s32.totalorder %s120, %s121
      %p135 = scmp.eq.s32.totalorder %s24, 1
      %p136 = por %p134, %p135
      %p138 = scmp.ne.s32.totalorder %s121, %s137
      %p139 = scmp.eq.s32.totalorder %s24, 0
      %p140 = por %p138, %p139
      %p141 = scmp.le.s32.totalorder 1, %s18
      %p142 = scmp.lt.s32.totalorder %s18, 3
      %p143 = pnand %p141, %p142
      %p144 = pneg %p143
      // Predicated region
      $region9: #{tpu_custom_call.1} parent=5 // pred_check
        _
      $region10: #{tpu_custom_call.1} parent=5 // pred_check_branch
        %146 = sbr.rel (%p143) target = $region12
      $region11: #{tpu_custom_call.1} parent=5 // pred_region
        %s147 = ssub.s32 %s18, 1
        // Predicated region
        $region13: #{tpu_custom_call.1} parent=11 // pred_check
          %p148 = pneg %p39
        $region14: #{tpu_custom_call.1} parent=11 // pred_check_branch
          %150 = sbr.rel (%p148) target = $region16
        $region15: #{tpu_custom_call.1} parent=11 // pred_region
          _
        $region16: #{tpu_custom_call.1} parent=11 // pred_fallthru
          _
        // Predicated region
        $region17: #{tpu_custom_call.1} parent=11 // pred_check
          %p151 = pneg %p86
        $region18: #{tpu_custom_call.1} parent=11 // pred_check_branch
          %153 = sbr.rel (%p151) target = $region20
        $region19: #{tpu_custom_call.1} parent=11 // pred_region
          %s155 = ssub.s32 2048, 2048
          %156 = vsyncadd [#allocation7], %s155
          %s157 = sshll.u32 [#allocation6], 4
          %s158 = int_to_ptr.vmem [resolvable:$true] %s157
          %163 = dma.hbm_to_vmem [thread:$0]  %s2, 2048, %s158, [#allocation7], 128, 128, 8
        $region20: #{tpu_custom_call.1} parent=11 // pred_fallthru
          _
        // Predicated region
        $region21: #{tpu_custom_call.1} parent=11 // pred_check
          %p164 = pneg %p107
        $region22: #{tpu_custom_call.1} parent=11 // pred_check_branch
          %166 = sbr.rel (%p164) target = $region24
        $region23: #{tpu_custom_call.1} parent=11 // pred_region
          %s168 = ssub.s32 2048, 2048
          %169 = vsyncadd [#allocation7], %s168
          %s170 = sshll.u32 [#allocation8], 4
          %s171 = int_to_ptr.vmem [resolvable:$true] %s170
          %176 = dma.hbm_to_vmem [thread:$0]  %s3, 2048, %s171, [#allocation7], 128, 128, 8
        $region24: #{tpu_custom_call.1} parent=11 // pred_fallthru
          _
      $region12: #{tpu_custom_call.1} parent=5 // pred_fallthru
        _
      %p177 = scmp.lt.s32.totalorder %s18, 2
      // Predicated region
      $region25: #{tpu_custom_call.1} parent=5 // pred_check
        %p178 = pneg %p177
      $region26: #{tpu_custom_call.1} parent=5 // pred_check_branch
        %180 = sbr.rel (%p178) target = $region28
      $region27: #{tpu_custom_call.1} parent=5 // pred_region
        // Predicated region
        $region29: #{tpu_custom_call.1} parent=27 // pred_check
          %p181 = pneg %p59
        $region30: #{tpu_custom_call.1} parent=27 // pred_check_branch
          %183 = sbr.rel (%p181) target = $region32
        $region31: #{tpu_custom_call.1} parent=27 // pred_region
          %s184 = sand.u32 %s49, 1
          %s185 = scalar_lea.sflag [#allocation4], %s184
          %s186 = sand.u32 %s49, 1
          %s187 = smul.addr %s186, 128
          %s188 = scalar_lea.vmem [#allocation3], %s187
          %s189 = smul.u32 16, %s18
          %s191 = ssub.s32 2048, 2048
          %192 = vsyncadd %s185, %s191
          %s193 = smul.addr %s189, 128
          %s194 = scalar_lea.hbm %s1, %s193
          %s195 = sshll.u32 %s188, 4
          %s196 = int_to_ptr.vmem [resolvable:$true] %s195
          %201 = dma.hbm_to_vmem [thread:$0]  %s194, 2048, %s196, %s185, 128, 128, 8
        $region32: #{tpu_custom_call.1} parent=27 // pred_fallthru
          _
      $region28: #{tpu_custom_call.1} parent=5 // pred_fallthru
        _
      %p202 = scmp.le.s32.totalorder 1, %s18
      %p203 = scmp.lt.s32.totalorder %s18, 3
      %p204 = pnand %p202, %p203
      %p205 = pneg %p204
      // Predicated region
      $region33: #{tpu_custom_call.1} parent=5 // pred_check
        _
      $region34: #{tpu_custom_call.1} parent=5 // pred_check_branch
        %207 = sbr.rel (%p204) target = $region36
      $region35: #{tpu_custom_call.1} parent=5 // pred_region
        %s208 = ssub.s32 %s18, 1
        %s209 = sand.u32 %s52, 1
        %s210 = scalar_lea.sflag [#allocation4], %s209
        %s211 = sand.u32 %s52, 1
        %s212 = smul.addr %s211, 128
        %s213 = scalar_lea.vmem [#allocation3], %s212
        // Predicated region
        $region37: #{tpu_custom_call.1} parent=35 // pred_check
          %p214 = pneg %p65
        $region38: #{tpu_custom_call.1} parent=35 // pred_check_branch
          %216 = sbr.rel (%p214) target = $region40
        $region39: #{tpu_custom_call.1} parent=35 // pred_region
          %217 = dma.done %s210, 2048
        $region40: #{tpu_custom_call.1} parent=35 // pred_fallthru
          _
        // Predicated region
        $region41: #{tpu_custom_call.1} parent=35 // pred_check
          %p218 = pneg %p86
        $region42: #{tpu_custom_call.1} parent=35 // pred_check_branch
          %220 = sbr.rel (%p218) target = $region44
        $region43: #{tpu_custom_call.1} parent=35 // pred_region
          %221 = dma.done [#allocation7], 2048
        $region44: #{tpu_custom_call.1} parent=35 // pred_fallthru
          _
        // Predicated region
        $region45: #{tpu_custom_call.1} parent=35 // pred_check
          %p222 = pneg %p107
        $region46: #{tpu_custom_call.1} parent=35 // pred_check_branch
          %224 = sbr.rel (%p222) target = $region48
        $region47: #{tpu_custom_call.1} parent=35 // pred_region
          %225 = dma.done [#allocation7], 2048
        $region48: #{tpu_custom_call.1} parent=35 // pred_fallthru
          _
        %p226 = pneg %p39
        %p227 = pneg %p36
        %s228 = sand.u32 %s52, 1
        %s229 = scalar_lea.sflag [#allocation4], %s228
        %s230 = sand.u32 %s52, 1
        %s231 = smul.addr %s230, 128
        %s232 = scalar_lea.vmem [#allocation3], %s231
        %p233 = pneg %p65
        %p234 = pneg %p62
        %p235 = pneg %p86
        %p236 = pneg %p83
        %p237 = pneg %p107
        %p238 = pneg %p104
        %p239 = pneg %p133
        %p240 = pneg %p130
        %s241 = sand.u32 %s120, 1
        %s242 = scalar_lea.sflag [#allocation5], %s241
        %s243 = sand.u32 %s120, 1
        %s244 = smul.addr %s243, 128
        %s245 = scalar_lea.vmem [#allocation9], %s244
        %s246 = smul.u32 16, %s23
        %s247 = smul.u32 16, %s23
        %v248 = vld [vmem:[%s213] sm:$0xff]
        %v249 = vld [vmem:[%s213 + $0x8] sm:$0xff]
        %v250 = vld [vmem:[%s213 + $0x10] sm:$0xff]
        %v251 = vld [vmem:[%s213 + $0x18] sm:$0xff]
        %v252 = vld [vmem:[%s213 + $0x20] sm:$0xff]
        %v253 = vld [vmem:[%s213 + $0x28] sm:$0xff]
        %v254 = vld [vmem:[%s213 + $0x30] sm:$0xff]
        %v255 = vld [vmem:[%s213 + $0x38] sm:$0xff]
        %v256 = vld [vmem:[%s213 + $0x40] sm:$0xff]
        %v257 = vld [vmem:[%s213 + $0x48] sm:$0xff]
        %v258 = vld [vmem:[%s213 + $0x50] sm:$0xff]
        %v259 = vld [vmem:[%s213 + $0x58] sm:$0xff]
        %v260 = vld [vmem:[%s213 + $0x60] sm:$0xff]
        %v261 = vld [vmem:[%s213 + $0x68] sm:$0xff]
        %v262 = vld [vmem:[%s213 + $0x70] sm:$0xff]
        %v263 = vld [vmem:[%s213 + $0x78] sm:$0xff]
        %v264 = vld [vmem:[#allocation6] sm:$0xff]
        %v265 = vld [vmem:[#allocation6 + $0x8] sm:$0xff]
        %v266 = vld [vmem:[#allocation6 + $0x10] sm:$0xff]
        %v267 = vld [vmem:[#allocation6 + $0x18] sm:$0xff]
        %v268 = vld [vmem:[#allocation6 + $0x20] sm:$0xff]
        %v269 = vld [vmem:[#allocation6 + $0x28] sm:$0xff]
        %v270 = vld [vmem:[#allocation6 + $0x30] sm:$0xff]
        %v271 = vld [vmem:[#allocation6 + $0x38] sm:$0xff]
        %v272 = vld [vmem:[#allocation6 + $0x40] sm:$0xff]
        %v273 = vld [vmem:[#allocation6 + $0x48] sm:$0xff]
        %v274 = vld [vmem:[#allocation6 + $0x50] sm:$0xff]
        %v275 = vld [vmem:[#allocation6 + $0x58] sm:$0xff]
        %v276 = vld [vmem:[#allocation6 + $0x60] sm:$0xff]
        %v277 = vld [vmem:[#allocation6 + $0x68] sm:$0xff]
        %v278 = vld [vmem:[#allocation6 + $0x70] sm:$0xff]
        %v279 = vld [vmem:[#allocation6 + $0x78] sm:$0xff]
        %280 = vmatprep.subr.mxu0 0.0
        %281 = vmatpush1.msra.mxu0 %v279
        %282 = vmatprep.subr.mxu0 0.0
        %283 = vmatpush1.msra.mxu0 %v278
        %284 = vmatprep.subr.mxu0 0.0
        %285 = vmatpush1.msra.mxu0 %v277
        %286 = vmatprep.subr.mxu0 0.0
        %287 = vmatpush1.msra.mxu0 %v276
        %288 = vmatprep.subr.mxu0 0.0
        %289 = vmatpush1.msra.mxu0 %v275
        %290 = vmatprep.subr.mxu0 0.0
        %291 = vmatpush1.msra.mxu0 %v274
        %292 = vmatprep.subr.mxu0 0.0
        %293 = vmatpush1.msra.mxu0 %v273
        %294 = vmatprep.subr.mxu0 0.0
        %295 = vmatpush1.msra.mxu0 %v272
        %296 = vmatprep.subr.mxu0 0.0
        %297 = vmatpush1.msra.mxu0 %v271
        %298 = vmatprep.subr.mxu0 0.0
        %299 = vmatpush1.msra.mxu0 %v270
        %300 = vmatprep.subr.mxu0 0.0
        %301 = vmatpush1.msra.mxu0 %v269
        %302 = vmatprep.subr.mxu0 0.0
        %303 = vmatpush1.msra.mxu0 %v268
        %304 = vmatprep.subr.mxu0 0.0
        %305 = vmatpush1.msra.mxu0 %v267
        %306 = vmatprep.subr.mxu0 0.0
        %307 = vmatpush1.msra.mxu0 %v266
        %308 = vmatprep.subr.mxu0 0.0
        %309 = vmatpush1.msra.mxu0 %v265
        %310 = vmatprep.subr.mxu0 0.0
        %311 = vmatpush1.msra.mxu0 %v264
        %312 = vmatprep.subr.mxu0 0.0
        %313 = vmatpush2.msra.mxu0 0.0
        %314 = vmatprep.subr.mxu0 0.0
        %315 = vmatpush2.msra.mxu0 0.0
        %316 = vmatprep.subr.mxu0 0.0
        %317 = vmatpush2.msra.mxu0 0.0
        %318 = vmatprep.subr.mxu0 0.0
        %319 = vmatpush2.msra.mxu0 0.0
        %320 = vmatprep.subr.mxu0 0.0
        %321 = vmatpush2.msra.mxu0 0.0
        %322 = vmatprep.subr.mxu0 0.0
        %323 = vmatpush2.msra.mxu0 0.0
        %324 = vmatprep.subr.mxu0 0.0
        %325 = vmatpush2.msra.mxu0 0.0
        %326 = vmatprep.subr.mxu0 0.0
        %327 = vmatpush2.msra.mxu0 0.0
        %328 = vmatprep.subr.mxu0 0.0
        %329 = vmatpush2.msra.mxu0 0.0
        %330 = vmatprep.subr.mxu0 0.0
        %331 = vmatpush2.msra.mxu0 0.0
        %332 = vmatprep.subr.mxu0 0.0
        %333 = vmatpush2.msra.mxu0 0.0
        %334 = vmatprep.subr.mxu0 0.0
        %335 = vmatpush2.msra.mxu0 0.0
        %336 = vmatprep.subr.mxu0 0.0
        %337 = vmatpush2.msra.mxu0 0.0
        %338 = vmatprep.subr.mxu0 0.0
        %339 = vmatpush2.msra.mxu0 0.0
        %340 = vmatprep.subr.mxu0 0.0
        %341 = vmatpush2.msra.mxu0 0.0
        %342 = vmatprep.subr.mxu0 0.0
        %343 = vmatpush2.msra.mxu0 0.0
        %344 = vmatprep.mubr.f32.mxu0 0.0
        %345 = vmatmul.mubr.f32.gmra.mxu0 %v248
        %v346 = vpop.f32.mrf.mxu0
        %v347 = vadd.f32 0.0, %v346
        %v348 = vpop.f32.mrf.mxu0
        %349 = vmatprep.mubr.f32.mxu0 0.0
        %350 = vmatmul.mubr.f32.gmra.mxu0 %v249
        %v351 = vpop.f32.mrf.mxu0
        %v352 = vadd.f32 0.0, %v351
        %v353 = vpop.f32.mrf.mxu0
        %354 = vmatprep.mubr.f32.mxu0 0.0
        %355 = vmatmul.mubr.f32.gmra.mxu0 %v250
        %v356 = vpop.f32.mrf.mxu0
        %v357 = vadd.f32 0.0, %v356
        %v358 = vpop.f32.mrf.mxu0
        %359 = vmatprep.mubr.f32.mxu0 0.0
        %360 = vmatmul.mubr.f32.gmra.mxu0 %v251
        %v361 = vpop.f32.mrf.mxu0
        %v362 = vadd.f32 0.0, %v361
        %v363 = vpop.f32.mrf.mxu0
        %364 = vmatprep.mubr.f32.mxu0 0.0
        %365 = vmatmul.mubr.f32.gmra.mxu0 %v252
        %v366 = vpop.f32.mrf.mxu0
        %v367 = vadd.f32 0.0, %v366
        %v368 = vpop.f32.mrf.mxu0
        %369 = vmatprep.mubr.f32.mxu0 0.0
        %370 = vmatmul.mubr.f32.gmra.mxu0 %v253
        %v371 = vpop.f32.mrf.mxu0
        %v372 = vadd.f32 0.0, %v371
        %v373 = vpop.f32.mrf.mxu0
        %374 = vmatprep.mubr.f32.mxu0 0.0
        %375 = vmatmul.mubr.f32.gmra.mxu0 %v254
        %v376 = vpop.f32.mrf.mxu0
        %v377 = vadd.f32 0.0, %v376
        %v378 = vpop.f32.mrf.mxu0
        %379 = vmatprep.mubr.f32.mxu0 0.0
        %380 = vmatmul.mubr.f32.gmra.mxu0 %v255
        %v381 = vpop.f32.mrf.mxu0
        %v382 = vadd.f32 0.0, %v381
        %v383 = vpop.f32.mrf.mxu0
        %384 = vmatprep.mubr.f32.mxu0 0.0
        %385 = vmatmul.mubr.f32.gmra.mxu0 %v256
        %v386 = vpop.f32.mrf.mxu0
        %v387 = vadd.f32 0.0, %v386
        %v388 = vpop.f32.mrf.mxu0
        %389 = vmatprep.mubr.f32.mxu0 0.0
        %390 = vmatmul.mubr.f32.gmra.mxu0 %v257
        %v391 = vpop.f32.mrf.mxu0
        %v392 = vadd.f32 0.0, %v391
        %v393 = vpop.f32.mrf.mxu0
        %394 = vmatprep.mubr.f32.mxu0 0.0
        %395 = vmatmul.mubr.f32.gmra.mxu0 %v258
        %v396 = vpop.f32.mrf.mxu0
        %v397 = vadd.f32 0.0, %v396
        %v398 = vpop.f32.mrf.mxu0
        %399 = vmatprep.mubr.f32.mxu0 0.0
        %400 = vmatmul.mubr.f32.gmra.mxu0 %v259
        %v401 = vpop.f32.mrf.mxu0
        %v402 = vadd.f32 0.0, %v401
        %v403 = vpop.f32.mrf.mxu0
        %404 = vmatprep.mubr.f32.mxu0 0.0
        %405 = vmatmul.mubr.f32.gmra.mxu0 %v260
        %v406 = vpop.f32.mrf.mxu0
        %v407 = vadd.f32 0.0, %v406
        %v408 = vpop.f32.mrf.mxu0
        %409 = vmatprep.mubr.f32.mxu0 0.0
        %410 = vmatmul.mubr.f32.gmra.mxu0 %v261
        %v411 = vpop.f32.mrf.mxu0
        %v412 = vadd.f32 0.0, %v411
        %v413 = vpop.f32.mrf.mxu0
        %414 = vmatprep.mubr.f32.mxu0 0.0
        %415 = vmatmul.mubr.f32.gmra.mxu0 %v262
        %v416 = vpop.f32.mrf.mxu0
        %v417 = vadd.f32 0.0, %v416
        %v418 = vpop.f32.mrf.mxu0
        %419 = vmatprep.mubr.f32.mxu0 0.0
        %420 = vmatmul.mubr.f32.gmra.mxu0 %v263
        %v421 = vpop.f32.mrf.mxu0
        %v422 = vadd.f32 0.0, %v421
        %v423 = vpop.f32.mrf.mxu0
        %424 = vdwg.mxu0
        %s425 = sld [smem:[#allocation2]]
        %v426 = vstv %s425
        %v427 = vrcp.pop %v426
        %s428 = vtos %v427
        %v429 = vstv %s428
        %v430 = vmul.f32 %v347, %v429
        %v431 = vmul.f32 %v352, %v429
        %v432 = vmul.f32 %v357, %v429
        %v433 = vmul.f32 %v362, %v429
        %v434 = vmul.f32 %v367, %v429
        %v435 = vmul.f32 %v372, %v429
        %v436 = vmul.f32 %v377, %v429
        %v437 = vmul.f32 %v382, %v429
        %v438 = vmul.f32 %v387, %v429
        %v439 = vmul.f32 %v392, %v429
        %v440 = vmul.f32 %v397, %v429
        %v441 = vmul.f32 %v402, %v429
        %v442 = vmul.f32 %v407, %v429
        %v443 = vmul.f32 %v412, %v429
        %v444 = vmul.f32 %v417, %v429
        %v445 = vmul.f32 %v422, %v429
        %446 = vmax.xlane.f32.xlu0 %v430
        %v447 = vpop.xlane.xlu0 %446
        %448 = vmax.xlane.f32.xlu0 %v431
        %v449 = vpop.xlane.xlu0 %448
        %450 = vmax.xlane.f32.xlu0 %v432
        %v451 = vpop.xlane.xlu0 %450
        %452 = vmax.xlane.f32.xlu0 %v433
        %v453 = vpop.xlane.xlu0 %452
        %454 = vmax.xlane.f32.xlu0 %v434
        %v455 = vpop.xlane.xlu0 %454
        %456 = vmax.xlane.f32.xlu0 %v435
        %v457 = vpop.xlane.xlu0 %456
        %458 = vmax.xlane.f32.xlu0 %v436
        %v459 = vpop.xlane.xlu0 %458
        %460 = vmax.xlane.f32.xlu0 %v437
        %v461 = vpop.xlane.xlu0 %460
        %462 = vmax.xlane.f32.xlu0 %v438
        %v463 = vpop.xlane.xlu0 %462
        %464 = vmax.xlane.f32.xlu0 %v439
        %v465 = vpop.xlane.xlu0 %464
        %466 = vmax.xlane.f32.xlu0 %v440
        %v467 = vpop.xlane.xlu0 %466
        %468 = vmax.xlane.f32.xlu0 %v441
        %v469 = vpop.xlane.xlu0 %468
        %470 = vmax.xlane.f32.xlu0 %v442
        %v471 = vpop.xlane.xlu0 %470
        %472 = vmax.xlane.f32.xlu0 %v443
        %v473 = vpop.xlane.xlu0 %472
        %474 = vmax.xlane.f32.xlu0 %v444
        %v475 = vpop.xlane.xlu0 %474
        %476 = vmax.xlane.f32.xlu0 %v445
        %v477 = vpop.xlane.xlu0 %476
        %v478 = vsub.f32 %v430, %v447
        %v479 = vsub.f32 %v431, %v449
        %v480 = vsub.f32 %v432, %v451
        %v481 = vsub.f32 %v433, %v453
        %v482 = vsub.f32 %v434, %v455
        %v483 = vsub.f32 %v435, %v457
        %v484 = vsub.f32 %v436, %v459
        %v485 = vsub.f32 %v437, %v461
        %v486 = vsub.f32 %v438, %v463
        %v487 = vsub.f32 %v439, %v465
        %v488 = vsub.f32 %v440, %v467
        %v489 = vsub.f32 %v441, %v469
        %v490 = vsub.f32 %v442, %v471
        %v491 = vsub.f32 %v443, %v473
        %v492 = vsub.f32 %v444, %v475
        %v493 = vsub.f32 %v445, %v477
        %v494 = vmul.f32 %v478, 1.442695
        %v495 = vpow.pop %v494
        %v496 = vmul.f32 %v479, 1.442695
        %v497 = vpow.pop %v496
        %v498 = vmul.f32 %v480, 1.442695
        %v499 = vpow.pop %v498
        %v500 = vmul.f32 %v481, 1.442695
        %v501 = vpow.pop %v500
        %v502 = vmul.f32 %v482, 1.442695
        %v503 = vpow.pop %v502
        %v504 = vmul.f32 %v483, 1.442695
        %v505 = vpow.pop %v504
        %v506 = vmul.f32 %v484, 1.442695
        %v507 = vpow.pop %v506
        %v508 = vmul.f32 %v485, 1.442695
        %v509 = vpow.pop %v508
        %v510 = vmul.f32 %v486, 1.442695
        %v511 = vpow.pop %v510
        %v512 = vmul.f32 %v487, 1.442695
        %v513 = vpow.pop %v512
        %v514 = vmul.f32 %v488, 1.442695
        %v515 = vpow.pop %v514
        %v516 = vmul.f32 %v489, 1.442695
        %v517 = vpow.pop %v516
        %v518 = vmul.f32 %v490, 1.442695
        %v519 = vpow.pop %v518
        %v520 = vmul.f32 %v491, 1.442695
        %v521 = vpow.pop %v520
        %v522 = vmul.f32 %v492, 1.442695
        %v523 = vpow.pop %v522
        %v524 = vmul.f32 %v493, 1.442695
        %v525 = vpow.pop %v524
        %526 = vadd.xlane.f32.xlu0 %v495
        %v527 = vpop.xlane.xlu0 %526
        %528 = vadd.xlane.f32.xlu0 %v497
        %v529 = vpop.xlane.xlu0 %528
        %530 = vadd.xlane.f32.xlu0 %v499
        %v531 = vpop.xlane.xlu0 %530
        %532 = vadd.xlane.f32.xlu0 %v501
        %v533 = vpop.xlane.xlu0 %532
        %534 = vadd.xlane.f32.xlu0 %v503
        %v535 = vpop.xlane.xlu0 %534
        %536 = vadd.xlane.f32.xlu0 %v505
        %v537 = vpop.xlane.xlu0 %536
        %538 = vadd.xlane.f32.xlu0 %v507
        %v539 = vpop.xlane.xlu0 %538
        %540 = vadd.xlane.f32.xlu0 %v509
        %v541 = vpop.xlane.xlu0 %540
        %542 = vadd.xlane.f32.xlu0 %v511
        %v543 = vpop.xlane.xlu0 %542
        %544 = vadd.xlane.f32.xlu0 %v513
        %v545 = vpop.xlane.xlu0 %544
        %546 = vadd.xlane.f32.xlu0 %v515
        %v547 = vpop.xlane.xlu0 %546
        %548 = vadd.xlane.f32.xlu0 %v517
        %v549 = vpop.xlane.xlu0 %548
        %550 = vadd.xlane.f32.xlu0 %v519
        %v551 = vpop.xlane.xlu0 %550
        %552 = vadd.xlane.f32.xlu0 %v521
        %v553 = vpop.xlane.xlu0 %552
        %554 = vadd.xlane.f32.xlu0 %v523
        %v555 = vpop.xlane.xlu0 %554
        %556 = vadd.xlane.f32.xlu0 %v525
        %v557 = vpop.xlane.xlu0 %556
        %v558 = vrcp.pop %v527
        %v559 = vmul.f32 %v495, %v558
        %v560 = vrcp.pop %v529
        %v561 = vmul.f32 %v497, %v560
        %v562 = vrcp.pop %v531
        %v563 = vmul.f32 %v499, %v562
        %v564 = vrcp.pop %v533
        %v565 = vmul.f32 %v501, %v564
        %v566 = vrcp.pop %v535
        %v567 = vmul.f32 %v503, %v566
        %v568 = vrcp.pop %v537
        %v569 = vmul.f32 %v505, %v568
        %v570 = vrcp.pop %v539
        %v571 = vmul.f32 %v507, %v570
        %v572 = vrcp.pop %v541
        %v573 = vmul.f32 %v509, %v572
        %v574 = vrcp.pop %v543
        %v575 = vmul.f32 %v511, %v574
        %v576 = vrcp.pop %v545
        %v577 = vmul.f32 %v513, %v576
        %v578 = vrcp.pop %v547
        %v579 = vmul.f32 %v515, %v578
        %v580 = vrcp.pop %v549
        %v581 = vmul.f32 %v517, %v580
        %v582 = vrcp.pop %v551
        %v583 = vmul.f32 %v519, %v582
        %v584 = vrcp.pop %v553
        %v585 = vmul.f32 %v521, %v584
        %v586 = vrcp.pop %v555
        %v587 = vmul.f32 %v523, %v586
        %v588 = vrcp.pop %v557
        %v589 = vmul.f32 %v525, %v588
        %v590 = vld [vmem:[#allocation8] sm:$0xff]
        %v591 = vld [vmem:[#allocation8 + $0x8] sm:$0xff]
        %v592 = vld [vmem:[#allocation8 + $0x10] sm:$0xff]
        %v593 = vld [vmem:[#allocation8 + $0x18] sm:$0xff]
        %v594 = vld [vmem:[#allocation8 + $0x20] sm:$0xff]
        %v595 = vld [vmem:[#allocation8 + $0x28] sm:$0xff]
        %v596 = vld [vmem:[#allocation8 + $0x30] sm:$0xff]
        %v597 = vld [vmem:[#allocation8 + $0x38] sm:$0xff]
        %v598 = vld [vmem:[#allocation8 + $0x40] sm:$0xff]
        %v599 = vld [vmem:[#allocation8 + $0x48] sm:$0xff]
        %v600 = vld [vmem:[#allocation8 + $0x50] sm:$0xff]
        %v601 = vld [vmem:[#allocation8 + $0x58] sm:$0xff]
        %v602 = vld [vmem:[#allocation8 + $0x60] sm:$0xff]
        %v603 = vld [vmem:[#allocation8 + $0x68] sm:$0xff]
        %v604 = vld [vmem:[#allocation8 + $0x70] sm:$0xff]
        %v605 = vld [vmem:[#allocation8 + $0x78] sm:$0xff]
        %606 = vmatprep.subr.mxu0 0.0
        %607 = vmatpush1.msra.mxu0 %v605
        %608 = vmatprep.subr.mxu0 0.0
        %609 = vmatpush1.msra.mxu0 %v604
        %610 = vmatprep.subr.mxu0 0.0
        %611 = vmatpush1.msra.mxu0 %v603
        %612 = vmatprep.subr.mxu0 0.0
        %613 = vmatpush1.msra.mxu0 %v602
        %614 = vmatprep.subr.mxu0 0.0
        %615 = vmatpush1.msra.mxu0 %v601
        %616 = vmatprep.subr.mxu0 0.0
        %617 = vmatpush1.msra.mxu0 %v600
        %618 = vmatprep.subr.mxu0 0.0
        %619 = vmatpush1.msra.mxu0 %v599
        %620 = vmatprep.subr.mxu0 0.0
        %621 = vmatpush1.msra.mxu0 %v598
        %622 = vmatprep.subr.mxu0 0.0
        %623 = vmatpush1.msra.mxu0 %v597
        %624 = vmatprep.subr.mxu0 0.0
        %625 = vmatpush1.msra.mxu0 %v596
        %626 = vmatprep.subr.mxu0 0.0
        %627 = vmatpush1.msra.mxu0 %v595
        %628 = vmatprep.subr.mxu0 0.0
        %629 = vmatpush1.msra.mxu0 %v594
        %630 = vmatprep.subr.mxu0 0.0
        %631 = vmatpush1.msra.mxu0 %v593
        %632 = vmatprep.subr.mxu0 0.0
        %633 = vmatpush1.msra.mxu0 %v592
        %634 = vmatprep.subr.mxu0 0.0
        %635 = vmatpush1.msra.mxu0 %v591
        %636 = vmatprep.subr.mxu0 0.0
        %637 = vmatpush1.msra.mxu0 %v590
        %638 = vmatprep.subr.mxu0 0.0
        %639 = vmatpush2.msra.mxu0 0.0
        %640 = vmatprep.subr.mxu0 0.0
        %641 = vmatpush2.msra.mxu0 0.0
        %642 = vmatprep.subr.mxu0 0.0
        %643 = vmatpush2.msra.mxu0 0.0
        %644 = vmatprep.subr.mxu0 0.0
        %645 = vmatpush2.msra.mxu0 0.0
        %646 = vmatprep.subr.mxu0 0.0
        %647 = vmatpush2.msra.mxu0 0.0
        %648 = vmatprep.subr.mxu0 0.0
        %649 = vmatpush2.msra.mxu0 0.0
        %650 = vmatprep.subr.mxu0 0.0
        %651 = vmatpush2.msra.mxu0 0.0
        %652 = vmatprep.subr.mxu0 0.0
        %653 = vmatpush2.msra.mxu0 0.0
        %654 = vmatprep.subr.mxu0 0.0
        %655 = vmatpush2.msra.mxu0 0.0
        %656 = vmatprep.subr.mxu0 0.0
        %657 = vmatpush2.msra.mxu0 0.0
        %658 = vmatprep.subr.mxu0 0.0
        %659 = vmatpush2.msra.mxu0 0.0
        %660 = vmatprep.subr.mxu0 0.0
        %661 = vmatpush2.msra.mxu0 0.0
        %662 = vmatprep.subr.mxu0 0.0
        %663 = vmatpush2.msra.mxu0 0.0
        %664 = vmatprep.subr.mxu0 0.0
        %665 = vmatpush2.msra.mxu0 0.0
        %666 = vmatprep.subr.mxu0 0.0
        %667 = vmatpush2.msra.mxu0 0.0
        %668 = vmatprep.subr.mxu0 0.0
        %669 = vmatpush2.msra.mxu0 0.0
        %670 = vmatprep.mubr.f32.mxu0 0.0
        %671 = vmatmul.mubr.f32.gmra.mxu0 %v559
        %v672 = vpop.f32.mrf.mxu0
        %v673 = vadd.f32 0.0, %v672
        %v674 = vpop.f32.mrf.mxu0
        %675 = vmatprep.mubr.f32.mxu0 0.0
        %676 = vmatmul.mubr.f32.gmra.mxu0 %v561
        %v677 = vpop.f32.mrf.mxu0
        %v678 = vadd.f32 0.0, %v677
        %v679 = vpop.f32.mrf.mxu0
        %680 = vmatprep.mubr.f32.mxu0 0.0
        %681 = vmatmul.mubr.f32.gmra.mxu0 %v563
        %v682 = vpop.f32.mrf.mxu0
        %v683 = vadd.f32 0.0, %v682
        %v684 = vpop.f32.mrf.mxu0
        %685 = vmatprep.mubr.f32.mxu0 0.0
        %686 = vmatmul.mubr.f32.gmra.mxu0 %v565
        %v687 = vpop.f32.mrf.mxu0
        %v688 = vadd.f32 0.0, %v687
        %v689 = vpop.f32.mrf.mxu0
        %690 = vmatprep.mubr.f32.mxu0 0.0
        %691 = vmatmul.mubr.f32.gmra.mxu0 %v567
        %v692 = vpop.f32.mrf.mxu0
        %v693 = vadd.f32 0.0, %v692
        %v694 = vpop.f32.mrf.mxu0
        %695 = vmatprep.mubr.f32.mxu0 0.0
        %696 = vmatmul.mubr.f32.gmra.mxu0 %v569
        %v697 = vpop.f32.mrf.mxu0
        %v698 = vadd.f32 0.0, %v697
        %v699 = vpop.f32.mrf.mxu0
        %700 = vmatprep.mubr.f32.mxu0 0.0
        %701 = vmatmul.mubr.f32.gmra.mxu0 %v571
        %v702 = vpop.f32.mrf.mxu0
        %v703 = vadd.f32 0.0, %v702
        %v704 = vpop.f32.mrf.mxu0
        %705 = vmatprep.mubr.f32.mxu0 0.0
        %706 = vmatmul.mubr.f32.gmra.mxu0 %v573
        %v707 = vpop.f32.mrf.mxu0
        %v708 = vadd.f32 0.0, %v707
        %v709 = vpop.f32.mrf.mxu0
        %710 = vmatprep.mubr.f32.mxu0 0.0
        %711 = vmatmul.mubr.f32.gmra.mxu0 %v575
        %v712 = vpop.f32.mrf.mxu0
        %v713 = vadd.f32 0.0, %v712
        %v714 = vpop.f32.mrf.mxu0
        %715 = vmatprep.mubr.f32.mxu0 0.0
        %716 = vmatmul.mubr.f32.gmra.mxu0 %v577
        %v717 = vpop.f32.mrf.mxu0
        %v718 = vadd.f32 0.0, %v717
        %v719 = vpop.f32.mrf.mxu0
        %720 = vmatprep.mubr.f32.mxu0 0.0
        %721 = vmatmul.mubr.f32.gmra.mxu0 %v579
        %v722 = vpop.f32.mrf.mxu0
        %v723 = vadd.f32 0.0, %v722
        %v724 = vpop.f32.mrf.mxu0
        %725 = vmatprep.mubr.f32.mxu0 0.0
        %726 = vmatmul.mubr.f32.gmra.mxu0 %v581
        %v727 = vpop.f32.mrf.mxu0
        %v728 = vadd.f32 0.0, %v727
        %v729 = vpop.f32.mrf.mxu0
        %730 = vmatprep.mubr.f32.mxu0 0.0
        %731 = vmatmul.mubr.f32.gmra.mxu0 %v583
        %v732 = vpop.f32.mrf.mxu0
        %v733 = vadd.f32 0.0, %v732
        %v734 = vpop.f32.mrf.mxu0
        %735 = vmatprep.mubr.f32.mxu0 0.0
        %736 = vmatmul.mubr.f32.gmra.mxu0 %v585
        %v737 = vpop.f32.mrf.mxu0
        %v738 = vadd.f32 0.0, %v737
        %v739 = vpop.f32.mrf.mxu0
        %740 = vmatprep.mubr.f32.mxu0 0.0
        %741 = vmatmul.mubr.f32.gmra.mxu0 %v587
        %v742 = vpop.f32.mrf.mxu0
        %v743 = vadd.f32 0.0, %v742
        %v744 = vpop.f32.mrf.mxu0
        %745 = vmatprep.mubr.f32.mxu0 0.0
        %746 = vmatmul.mubr.f32.gmra.mxu0 %v589
        %v747 = vpop.f32.mrf.mxu0
        %v748 = vadd.f32 0.0, %v747
        %v749 = vpop.f32.mrf.mxu0
        %750 = vdwg.mxu0
        %751 = vst [vmem:[%s245] sm:$0xff] %v673
        %752 = vst [vmem:[%s245 + $0x8] sm:$0xff] %v678
        %753 = vst [vmem:[%s245 + $0x10] sm:$0xff] %v683
        %754 = vst [vmem:[%s245 + $0x18] sm:$0xff] %v688
        %755 = vst [vmem:[%s245 + $0x20] sm:$0xff] %v693
        %756 = vst [vmem:[%s245 + $0x28] sm:$0xff] %v698
        %757 = vst [vmem:[%s245 + $0x30] sm:$0xff] %v703
        %758 = vst [vmem:[%s245 + $0x38] sm:$0xff] %v708
        %759 = vst [vmem:[%s245 + $0x40] sm:$0xff] %v713
        %760 = vst [vmem:[%s245 + $0x48] sm:$0xff] %v718
        %761 = vst [vmem:[%s245 + $0x50] sm:$0xff] %v723
        %762 = vst [vmem:[%s245 + $0x58] sm:$0xff] %v728
        %763 = vst [vmem:[%s245 + $0x60] sm:$0xff] %v733
        %764 = vst [vmem:[%s245 + $0x68] sm:$0xff] %v738
        %765 = vst [vmem:[%s245 + $0x70] sm:$0xff] %v743
        %766 = vst [vmem:[%s245 + $0x78] sm:$0xff] %v748
        %s767 = sand.u32 %s120, 1
        %s768 = scalar_lea.sflag [#allocation5], %s767
        %s769 = sand.u32 %s120, 1
        %s770 = smul.addr %s769, 128
        %s771 = scalar_lea.vmem [#allocation9], %s770
        // Predicated region
        $region49: #{tpu_custom_call.1} parent=35 // pred_check
          %p772 = pneg %p130
        $region50: #{tpu_custom_call.1} parent=35 // pred_check_branch
          %774 = sbr.rel (%p772) target = $region52
        $region51: #{tpu_custom_call.1} parent=35 // pred_region
          %s775 = smul.u32 16, %s23
          %s777 = ssub.s32 2048, 2048
          %778 = vsyncadd %s768, %s777
          %s779 = smul.addr %s775, 128
          %s780 = scalar_lea.hbm %s4, %s779
          %s781 = sshll.u32 %s771, 4
          %s782 = int_to_ptr.vmem [resolvable:$true] %s781
          %787 = dma.vmem_to_hbm [thread:$0]  %s782, 2048, %s780, %s768, 128, 128, 8
        $region52: #{tpu_custom_call.1} parent=35 // pred_fallthru
          _
      $region36: #{tpu_custom_call.1} parent=5 // pred_fallthru
        _
      %p788 = scmp.le.s32.totalorder 2, %s18
      // Predicated region
      $region53: #{tpu_custom_call.1} parent=5 // pred_check
        %p789 = pneg %p788
      $region54: #{tpu_custom_call.1} parent=5 // pred_check_branch
        %791 = sbr.rel (%p789) target = $region56
      $region55: #{tpu_custom_call.1} parent=5 // pred_region
        %s792 = ssub.s32 %s18, 2
        // Predicated region
        $region57: #{tpu_custom_call.1} parent=55 // pred_check
          %p793 = pneg %p136
        $region58: #{tpu_custom_call.1} parent=55 // pred_check_branch
          %795 = sbr.rel (%p793) target = $region60
        $region59: #{tpu_custom_call.1} parent=55 // pred_region
          %s796 = sand.u32 %s121, 1
          %s797 = scalar_lea.sflag [#allocation5], %s796
          %s798 = sand.u32 %s121, 1
          %s799 = smul.addr %s798, 128
          %s800 = scalar_lea.vmem [#allocation9], %s799
          %801 = dma.done %s797, 2048
        $region60: #{tpu_custom_call.1} parent=55 // pred_fallthru
          _
      $region56: #{tpu_custom_call.1} parent=5 // pred_fallthru
        _
    $region6: #{tpu_custom_call.1} parent=1 // loop_footer
      %s22 = sadd.s32 1, %s18
    $region7: #{tpu_custom_call.1} parent=1 // loop_footer_branch
      %17 = sbr.rel target = $region3
    $region8: #{tpu_custom_call.1} parent=1 // loop_exit
      _
    %802 = vsyncpa [#allocation4], 1
    %s803 = scalar_lea.sflag [#allocation4], 1
    %804 = vsyncpa %s803, 1
    %805 = vsyncpa [#allocation7], 1
    %806 = vsyncpa [#allocation5], 1
    %s807 = scalar_lea.sflag [#allocation5], 1
    %808 = vsyncpa %s807, 1

</llo_original>
